<compile_context>
chip_gen: v6e
topology: v6e:2x2x1
jax: 0.10.0
libtpu: 0.0.40
codegen_flags: <defaults>
</compile_context>

<pallas_src>
import functools

import jax
import jax.numpy as jnp
from jax.experimental import pallas as pl
from jax.experimental.pallas import tpu as pltpu

EPS = 1e-5


def _pick_samples_per_block(N, L):
    """Samples per grid step.

    Prefer blocks whose column count B*L is a multiple of 128 (unmasked,
    lane-dense stores), in [256, 4096] columns, with >= 2 grid steps (v7x has
    two TensorCores).  Otherwise fall back to the whole batch in one block
    (full-extent block shapes are always legal and the working set stays tiny
    at the shapes this module is used with).
    """
    cands = [b for b in range(1, N) if N % b == 0 and (b * L) % 128 == 0]
    good = [b for b in cands if 256 <= b * L <= 4096]
    if good:
        return min(good)
    modest = [b for b in cands if b * L <= 4096]
    if modest:
        return max(modest)
    # TODO(synk): for very large N*L with no lane-aligned divisor, pad the
    # column axis instead of falling back to a single block.
    return N


def _make_conv_relu_stats_kernel(K, dilation, n_adj, L, CB):
    # Per-tap circular lane offset within a sample, normalized into [0, L).
    offsets = [((k - n_adj) * dilation) % L for k in range(K)]

    def kernel(lpos_ref, x_ref, w_ref, b_ref, y_ref, st_ref):
        # lpos_ref: (1, CB) int32     column index modulo L (same every block)
        # x_ref:    (C_in, CB)        B whole samples flattened on the lane axis
        # w_ref:    (C_out, K*C_in)   conv taps folded into the contraction dim
        # b_ref:    (C_out, 1)        conv bias (f32)
        # y_ref:    (C_out, CB)       conv + ReLU output (f32)
        # st_ref:   (1, C_out, 2)     per-block [sum(y), sum(y*y)]
        x = x_ref[...]
        lpos = lpos_ref[...]
        parts = []
        for o in offsets:
            if o == 0:
                parts.append(x)
            else:
                # r1[c] = x[c + o]       tap stays inside the sample
                # r2[c] = x[c + o - L]   tap wrapped back into the same sample
                r1 = pltpu.roll(x, shift=CB - o, axis=1)
                r2 = pltpu.roll(x, shift=L - o, axis=1)
                parts.append(jnp.where(lpos < (L - o), r1, r2))
        slab = jnp.concatenate(parts, axis=0)                    # (K*C_in, CB)
        acc = jnp.dot(w_ref[...], slab, preferred_element_type=jnp.float32)
        y = jnp.maximum(acc + b_ref[...], 0.0)                   # bias + ReLU, f32
        y_ref[...] = y.astype(y_ref.dtype)
        # One-pass BN statistics packed into a single tiny output block.
        st_ref[0, :, 0:1] = jnp.sum(y, axis=1, keepdims=True)
        st_ref[0, :, 1:2] = jnp.sum(y * y, axis=1, keepdims=True)

    return kernel


def basic_block_forward(x, weight, bias, gamma, beta, n_adj=4, dilation=1,
                        use_bf16=False):
    """x: (N, C_in, L); weight: (C_out, C_in, K) with K = 2*n_adj + 1.

    Matches BasicBlock(conv_type='grid'/'dgrid') forward in training mode:
      circular pad by n_adj*dilation -> Conv1d(kernel_size=K, dilation)
      -> ReLU -> BatchNorm1d with batch statistics (biased var, eps=1e-5, affine).
    Returns (N, C_out, L) float32.
    """
    N, C_in, L = x.shape
    C_out, _, K = weight.shape
    assert K == 2 * n_adj + 1

    in_dtype = jnp.bfloat16 if use_bf16 else jnp.float32
    B = _pick_samples_per_block(N, L)
    G = N // B
    CB = B * L

    # Layout plumbing (fused XLA passes; no circular halo copy, no im2col):
    x2 = jnp.transpose(x, (1, 0, 2)).reshape(C_in, N * L).astype(in_dtype)
    w2 = jnp.transpose(weight, (0, 2, 1)).reshape(C_out, K * C_in).astype(in_dtype)
    b_col = bias.reshape(C_out, 1).astype(jnp.float32)
    lpos = jnp.tile(jnp.arange(L, dtype=jnp.int32), B).reshape(1, CB)

    itemsize = 2 if use_bf16 else 4
    cost = pl.CostEstimate(
        flops=2 * C_out * K * C_in * N * L + 5 * C_out * N * L,
        transcendentals=0,
        bytes_accessed=(C_in * N * L + C_out * K * C_in) * itemsize
                       + (C_out * N * L + G * C_out * 2) * 4 + CB * 4)

    kernel = _make_conv_relu_stats_kernel(K, dilation, n_adj, L, CB)
    y2, stats = pl.pallas_call(
        kernel,
        out_shape=(
            jax.ShapeDtypeStruct((C_out, N * L), jnp.float32),
            jax.ShapeDtypeStruct((G, C_out, 2), jnp.float32),
        ),
        grid=(G,),
        in_specs=[
            pl.BlockSpec((1, CB), lambda g: (0, 0)),            # lpos (constant)
            pl.BlockSpec((C_in, CB), lambda g: (0, g)),          # x columns
            pl.BlockSpec((C_out, K * C_in), lambda g: (0, 0)),   # folded weights
            pl.BlockSpec((C_out, 1), lambda g: (0, 0)),          # bias
        ],
        out_specs=(
            pl.BlockSpec((C_out, CB), lambda g: (0, g)),         # y columns
            pl.BlockSpec((1, C_out, 2), lambda g: (g, 0, 0)),    # per-block stats
        ),
        compiler_params=pltpu.CompilerParams(
            dimension_semantics=("parallel",),
            # Blocks are capped at 4096 columns -> ~1.5 MiB working set, well
            # under v7x's 64 MiB physical VMEM; 32 MiB also fits v5e/v6e.
            vmem_limit_bytes=32 * 1024 * 1024),
        cost_estimate=cost,
    )(lpos, x2, w2, b_col)

    # O(C_out) epilogue: fold batch statistics into per-channel scale/shift.
    count = N * L
    tot = jnp.sum(stats, axis=0)                               # (C_out, 2)
    mean = tot[:, 0] / count
    var = jnp.maximum(tot[:, 1] / count - mean * mean, 0.0)    # biased variance
    # TODO(synk): PyTorch's running_mean/running_var buffer updates (a training
    # side effect) are not reproduced; the output only depends on batch stats.
    scale = gamma.astype(jnp.float32) * jax.lax.rsqrt(var + EPS)
    shift = beta.astype(jnp.float32) - mean * scale

    # BN affine + transpose back to NCL: one fused XLA elementwise pass over y
    # (perf-review option (a): no second Pallas trip through narrow tiles).
    y3 = y2.reshape(C_out, N, L)
    out = jnp.transpose(y3 * scale[:, None, None] + shift[:, None, None],
                        (1, 0, 2))
    return out


def reference_forward(x, weight, bias, gamma, beta, n_adj=4, dilation=1):
    """Pure-JAX reference for validation."""
    pad = n_adj * dilation
    if pad > 0:
        x_pad = jnp.concatenate([x[..., -pad:], x, x[..., :pad]], axis=2)
    else:
        x_pad = x
    y = jax.lax.conv_general_dilated(
        x_pad, weight, window_strides=(1,), padding="VALID",
        rhs_dilation=(dilation,),
        dimension_numbers=("NCH", "OIH", "NCH"))
    y = y + bias[None, :, None]
    y = jnp.maximum(y, 0.0)
    mean = jnp.mean(y, axis=(0, 2), keepdims=True)
    var = jnp.mean((y - mean) ** 2, axis=(0, 2), keepdims=True)
    return ((y - mean) * jax.lax.rsqrt(var + EPS) * gamma[None, :, None]
            + beta[None, :, None])


if __name__ == "__main__":
    # BasicBlock(state_dim=4, out_state_dim=8, n_adj=4) on x of shape (2, 4, 16),
    # exercised for conv_type='grid' (dilation=1) and 'dgrid' (dilation=2).
    N, C_in, C_out, L, n_adj = 2, 4, 8, 16, 4
    K = 2 * n_adj + 1

    key = jax.random.PRNGKey(0)
    kx, kw, kb = jax.random.split(key, 3)
    x = jax.random.normal(kx, (N, C_in, L), dtype=jnp.float32)
    # Deterministic Conv1d-style init (uniform in +/- 1/sqrt(fan_in)).
    bound = 1.0 / jnp.sqrt(jnp.float32(C_in * K))
    weight = jax.random.uniform(kw, (C_out, C_in, K), jnp.float32, -bound, bound)
    bias = jax.random.uniform(kb, (C_out,), jnp.float32, -bound, bound)
    # BatchNorm1d default affine init.
    gamma = jnp.ones((C_out,), jnp.float32)
    beta = jnp.zeros((C_out,), jnp.float32)

    for dilation in (1, 2):
        ref = reference_forward(x, weight, bias, gamma, beta,
                                n_adj=n_adj, dilation=dilation)

        # f32 path (default; v5e-friendly), tight tolerance.
        fwd = jax.jit(functools.partial(basic_block_forward,
                                        n_adj=n_adj, dilation=dilation))
        out = jax.block_until_ready(fwd(x, weight, bias, gamma, beta))
        assert out.shape == (N, C_out, L), out.shape
        err = float(jnp.max(jnp.abs(out - ref)))
        assert jnp.allclose(out, ref, atol=1e-4, rtol=1e-4), err

        # bf16 DMA/MXU path (v6e/v7x bandwidth saving), looser tolerance.
        fwd16 = jax.jit(functools.partial(basic_block_forward, n_adj=n_adj,
                                          dilation=dilation, use_bf16=True))
        out16 = jax.block_until_ready(fwd16(x, weight, bias, gamma, beta))
        err16 = float(jnp.max(jnp.abs(out16 - ref)))
        assert jnp.allclose(out16, ref, atol=5e-2, rtol=5e-2), err16

    print("KERNEL_OK")
</pallas_src>

<mosaic_0001>
module attributes {stable_mosaic.version = 11 : i64} {
  func.func @kernel(%arg0: i32, %arg1: memref<1x32xi32, #tpu.memory_space<vmem>>, %arg2: memref<4x32xf32, #tpu.memory_space<vmem>>, %arg3: memref<8x36xf32, #tpu.memory_space<vmem>>, %arg4: memref<8x1xf32, #tpu.memory_space<vmem>>, %arg5: memref<8x32xf32, #tpu.memory_space<vmem>>, %arg6: memref<1x8x2xf32, #tpu.memory_space<vmem>>) attributes {dimension_semantics = [#tpu.dimension_semantics<parallel>], iteration_bounds = array<i64: 1>, scalar_prefetch = 0 : i64, scratch_operands = 0 : i64, tpu.core_type = #tpu.core_type<tc>, window_params = [{pipeline_mode = #tpu.pipeline_mode<synchronous>, transform_indices = @transform_0, window_bounds = array<i64: 1, 32>}, {transform_indices = @transform_1, window_bounds = array<i64: 4, 32>}, {pipeline_mode = #tpu.pipeline_mode<synchronous>, transform_indices = @transform_2, window_bounds = array<i64: 8, 36>}, {pipeline_mode = #tpu.pipeline_mode<synchronous>, transform_indices = @transform_3, window_bounds = array<i64: 8, 1>}, {transform_indices = @transform_4, window_bounds = array<i64: 8, 32>}, {transform_indices = @transform_5, window_bounds = array<i64: 1, 8, 2>}]} {
    %c0 = arith.constant 0 : index
    %c0_0 = arith.constant 0 : index
    %0 = vector.load %arg2[%c0, %c0_0] : memref<4x32xf32, #tpu.memory_space<vmem>>, vector<4x32xf32>
    %c0_1 = arith.constant 0 : index
    %c0_2 = arith.constant 0 : index
    %1 = vector.load %arg1[%c0_1, %c0_2] : memref<1x32xi32, #tpu.memory_space<vmem>>, vector<1x32xi32>
    %c20_i32 = arith.constant 20 : i32
    %2 = tpu.dynamic_rotate %0 by %c20_i32 dim 1 : vector<4x32xf32>, i32 -> vector<4x32xf32>
    %c4_i32 = arith.constant 4 : i32
    %3 = tpu.dynamic_rotate %0 by %c4_i32 dim 1 : vector<4x32xf32>, i32 -> vector<4x32xf32>
    %c4_i32_3 = arith.constant 4 : i32
    %4 = vector.broadcast %c4_i32_3 : i32 to vector<1x32xi32>
    %5 = arith.cmpi slt, %1, %4 : vector<1x32xi32>
    %6 = vector.shape_cast %5 : vector<1x32xi1> to vector<1x32xi1>
    %7 = vector.broadcast %6 : vector<1x32xi1> to vector<4x32xi1>
    %8 = arith.select %7, %2, %3 : vector<4x32xi1>, vector<4x32xf32>
    %c19_i32 = arith.constant 19 : i32
    %9 = tpu.dynamic_rotate %0 by %c19_i32 dim 1 : vector<4x32xf32>, i32 -> vector<4x32xf32>
    %c3_i32 = arith.constant 3 : i32
    %10 = tpu.dynamic_rotate %0 by %c3_i32 dim 1 : vector<4x32xf32>, i32 -> vector<4x32xf32>
    %c3_i32_4 = arith.constant 3 : i32
    %11 = vector.broadcast %c3_i32_4 : i32 to vector<1x32xi32>
    %12 = arith.cmpi slt, %1, %11 : vector<1x32xi32>
    %13 = vector.shape_cast %12 : vector<1x32xi1> to vector<1x32xi1>
    %14 = vector.broadcast %13 : vector<1x32xi1> to vector<4x32xi1>
    %15 = arith.select %14, %9, %10 : vector<4x32xi1>, vector<4x32xf32>
    %c18_i32 = arith.constant 18 : i32
    %16 = tpu.dynamic_rotate %0 by %c18_i32 dim 1 : vector<4x32xf32>, i32 -> vector<4x32xf32>
    %c2_i32 = arith.constant 2 : i32
    %17 = tpu.dynamic_rotate %0 by %c2_i32 dim 1 : vector<4x32xf32>, i32 -> vector<4x32xf32>
    %c2_i32_5 = arith.constant 2 : i32
    %18 = vector.broadcast %c2_i32_5 : i32 to vector<1x32xi32>
    %19 = arith.cmpi slt, %1, %18 : vector<1x32xi32>
    %20 = vector.shape_cast %19 : vector<1x32xi1> to vector<1x32xi1>
    %21 = vector.broadcast %20 : vector<1x32xi1> to vector<4x32xi1>
    %22 = arith.select %21, %16, %17 : vector<4x32xi1>, vector<4x32xf32>
    %c17_i32 = arith.constant 17 : i32
    %23 = tpu.dynamic_rotate %0 by %c17_i32 dim 1 : vector<4x32xf32>, i32 -> vector<4x32xf32>
    %c1_i32 = arith.constant 1 : i32
    %24 = tpu.dynamic_rotate %0 by %c1_i32 dim 1 : vector<4x32xf32>, i32 -> vector<4x32xf32>
    %c1_i32_6 = arith.constant 1 : i32
    %25 = vector.broadcast %c1_i32_6 : i32 to vector<1x32xi32>
    %26 = arith.cmpi slt, %1, %25 : vector<1x32xi32>
    %27 = vector.shape_cast %26 : vector<1x32xi1> to vector<1x32xi1>
    %28 = vector.broadcast %27 : vector<1x32xi1> to vector<4x32xi1>
    %29 = arith.select %28, %23, %24 : vector<4x32xi1>, vector<4x32xf32>
    %c31_i32 = arith.constant 31 : i32
    %30 = tpu.dynamic_rotate %0 by %c31_i32 dim 1 : vector<4x32xf32>, i32 -> vector<4x32xf32>
    %c15_i32 = arith.constant 15 : i32
    %31 = tpu.dynamic_rotate %0 by %c15_i32 dim 1 : vector<4x32xf32>, i32 -> vector<4x32xf32>
    %c15_i32_7 = arith.constant 15 : i32
    %32 = vector.broadcast %c15_i32_7 : i32 to vector<1x32xi32>
    %33 = arith.cmpi slt, %1, %32 : vector<1x32xi32>
    %34 = vector.shape_cast %33 : vector<1x32xi1> to vector<1x32xi1>
    %35 = vector.broadcast %34 : vector<1x32xi1> to vector<4x32xi1>
    %36 = arith.select %35, %30, %31 : vector<4x32xi1>, vector<4x32xf32>
    %c30_i32 = arith.constant 30 : i32
    %37 = tpu.dynamic_rotate %0 by %c30_i32 dim 1 : vector<4x32xf32>, i32 -> vector<4x32xf32>
    %c14_i32 = arith.constant 14 : i32
    %38 = tpu.dynamic_rotate %0 by %c14_i32 dim 1 : vector<4x32xf32>, i32 -> vector<4x32xf32>
    %c14_i32_8 = arith.constant 14 : i32
    %39 = vector.broadcast %c14_i32_8 : i32 to vector<1x32xi32>
    %40 = arith.cmpi slt, %1, %39 : vector<1x32xi32>
    %41 = vector.shape_cast %40 : vector<1x32xi1> to vector<1x32xi1>
    %42 = vector.broadcast %41 : vector<1x32xi1> to vector<4x32xi1>
    %43 = arith.select %42, %37, %38 : vector<4x32xi1>, vector<4x32xf32>
    %c29_i32 = arith.constant 29 : i32
    %44 = tpu.dynamic_rotate %0 by %c29_i32 dim 1 : vector<4x32xf32>, i32 -> vector<4x32xf32>
    %c13_i32 = arith.constant 13 : i32
    %45 = tpu.dynamic_rotate %0 by %c13_i32 dim 1 : vector<4x32xf32>, i32 -> vector<4x32xf32>
    %c13_i32_9 = arith.constant 13 : i32
    %46 = vector.broadcast %c13_i32_9 : i32 to vector<1x32xi32>
    %47 = arith.cmpi slt, %1, %46 : vector<1x32xi32>
    %48 = vector.shape_cast %47 : vector<1x32xi1> to vector<1x32xi1>
    %49 = vector.broadcast %48 : vector<1x32xi1> to vector<4x32xi1>
    %50 = arith.select %49, %44, %45 : vector<4x32xi1>, vector<4x32xf32>
    %c28_i32 = arith.constant 28 : i32
    %51 = tpu.dynamic_rotate %0 by %c28_i32 dim 1 : vector<4x32xf32>, i32 -> vector<4x32xf32>
    %c12_i32 = arith.constant 12 : i32
    %52 = tpu.dynamic_rotate %0 by %c12_i32 dim 1 : vector<4x32xf32>, i32 -> vector<4x32xf32>
    %c12_i32_10 = arith.constant 12 : i32
    %53 = vector.broadcast %c12_i32_10 : i32 to vector<1x32xi32>
    %54 = arith.cmpi slt, %1, %53 : vector<1x32xi32>
    %55 = vector.shape_cast %54 : vector<1x32xi1> to vector<1x32xi1>
    %56 = vector.broadcast %55 : vector<1x32xi1> to vector<4x32xi1>
    %57 = arith.select %56, %51, %52 : vector<4x32xi1>, vector<4x32xf32>
    %58 = tpu.concatenate %8, %15, %22, %29, %0, %36, %43, %50, %57 in 0 : vector<4x32xf32>, vector<4x32xf32>, vector<4x32xf32>, vector<4x32xf32>, vector<4x32xf32>, vector<4x32xf32>, vector<4x32xf32>, vector<4x32xf32>, vector<4x32xf32> -> vector<36x32xf32>
    %c0_11 = arith.constant 0 : index
    %c0_12 = arith.constant 0 : index
    %59 = vector.load %arg3[%c0_11, %c0_12] : memref<8x36xf32, #tpu.memory_space<vmem>>, vector<8x36xf32>
    %cst = arith.constant dense<0.000000e+00> : vector<8x32xf32>
    %60 = tpu.matmul %59, %58, %cst {dimension_numbers = #tpu.dot_dimension_numbers<[1], [0], [0], [1], [0, 0, 1, 1], [], []>} : vector<8x36xf32>, vector<36x32xf32>, vector<8x32xf32> -> vector<8x32xf32>
    %c0_13 = arith.constant 0 : index
    %c0_14 = arith.constant 0 : index
    %61 = vector.load %arg4[%c0_13, %c0_14] : memref<8x1xf32, #tpu.memory_space<vmem>>, vector<8x1xf32>
    %62 = vector.broadcast %61 : vector<8x1xf32> to vector<8x32xf32>
    %63 = arith.addf %60, %62 : vector<8x32xf32>
    %cst_15 = arith.constant 0.000000e+00 : f32
    %64 = vector.broadcast %cst_15 : f32 to vector<8x32xf32>
    %65 = arith.maximumf %63, %64 : vector<8x32xf32>
    %c0_16 = arith.constant 0 : index
    %c0_17 = arith.constant 0 : index
    %66 = vector.load %arg5[%c0_16, %c0_17] : memref<8x32xf32, #tpu.memory_space<vmem>>, vector<8x32xf32>
    tpu.vector_store %arg5[%c0_16, %c0_17], %65 {strides = array<i32>} : memref<8x32xf32, #tpu.memory_space<vmem>>, vector<8x32xf32>,
    %cst_18 = arith.constant dense<0.000000e+00> : vector<8xf32>
    %67 = vector.multi_reduction <add>, %65, %cst_18 [1] : vector<8x32xf32> to vector<8xf32>
    %68 = vector.shape_cast %67 : vector<8xf32> to vector<8x1xf32>
    %c0_19 = arith.constant 0 : index
    %c0_20 = arith.constant 0 : index
    %c0_21 = arith.constant 0 : index
    %69 = vector.load %arg6[%c0_19, %c0_20, %c0_21] : memref<1x8x2xf32, #tpu.memory_space<vmem>>, vector<1x8x1xf32>
    %70 = vector.shape_cast %69 : vector<1x8x1xf32> to vector<8x1xf32>
    %71 = vector.shape_cast %68 : vector<8x1xf32> to vector<1x8x1xf32>
    tpu.vector_store %arg6[%c0_19, %c0_20, %c0_21], %71 {strides = array<i32>} : memref<1x8x2xf32, #tpu.memory_space<vmem>>, vector<1x8x1xf32>,
    %72 = arith.mulf %65, %65 : vector<8x32xf32>
    %cst_22 = arith.constant dense<0.000000e+00> : vector<8xf32>
    %73 = vector.multi_reduction <add>, %72, %cst_22 [1] : vector<8x32xf32> to vector<8xf32>
    %74 = vector.shape_cast %73 : vector<8xf32> to vector<8x1xf32>
    %c0_23 = arith.constant 0 : index
    %c0_24 = arith.constant 0 : index
    %c1 = arith.constant 1 : index
    %75 = vector.load %arg6[%c0_23, %c0_24, %c1] : memref<1x8x2xf32, #tpu.memory_space<vmem>>, vector<1x8x1xf32>
    %76 = vector.shape_cast %75 : vector<1x8x1xf32> to vector<8x1xf32>
    %77 = vector.shape_cast %74 : vector<8x1xf32> to vector<1x8x1xf32>
    tpu.vector_store %arg6[%c0_23, %c0_24, %c1], %77 {strides = array<i32>} : memref<1x8x2xf32, #tpu.memory_space<vmem>>, vector<1x8x1xf32>,
    return
  }
  func.func @transform_0(%arg0: i32) -> (i32, i32) {
    %c0_i32 = arith.constant 0 : i32
    %c0_i32_0 = arith.constant 0 : i32
    %c0_i32_1 = arith.constant 0 : i32
    return %c0_i32, %c0_i32_0 : i32, i32
  }
  func.func @transform_1(%arg0: i32) -> (i32, i32) {
    %c0_i32 = arith.constant 0 : i32
    %c0_i32_0 = arith.constant 0 : i32
    return %c0_i32, %arg0 : i32, i32
  }
  func.func @transform_2(%arg0: i32) -> (i32, i32) {
    %c0_i32 = arith.constant 0 : i32
    %c0_i32_0 = arith.constant 0 : i32
    %c0_i32_1 = arith.constant 0 : i32
    return %c0_i32, %c0_i32_0 : i32, i32
  }
  func.func @transform_3(%arg0: i32) -> (i32, i32) {
    %c0_i32 = arith.constant 0 : i32
    %c0_i32_0 = arith.constant 0 : i32
    %c0_i32_1 = arith.constant 0 : i32
    return %c0_i32, %c0_i32_0 : i32, i32
  }
  func.func @transform_4(%arg0: i32) -> (i32, i32) {
    %c0_i32 = arith.constant 0 : i32
    %c0_i32_0 = arith.constant 0 : i32
    return %c0_i32, %arg0 : i32, i32
  }
  func.func @transform_5(%arg0: i32) -> (i32, i32, i32) {
    %c0_i32 = arith.constant 0 : i32
    %c0_i32_0 = arith.constant 0 : i32
    %c0_i32_1 = arith.constant 0 : i32
    return %arg0, %c0_i32, %c0_i32_0 : i32, i32, i32
  }
}

</mosaic_0001>

<llo_original>
// kernel: tile.9
$region0: #{tile.9}
  %s0 = inlined_call_operand.vmem [shape: s32[2,16], index: 0, kind: input, shape index: {}]
  %s1 = inlined_call_operand.vmem [shape: s32[1,32], index: 1, kind: output, shape index: {}]
  $region1: #{tile.9} parent=0
    #allocation0 [shape = 'u8[4096]{0}', space=vmem, size = 0x1000, scoped, tag = 'scoped mem for output reshape']
    #allocation1 [shape = 'u8[4096]{0}', space=vmem, size = 0x1000, scoped, tag = 'scoped mem for input reshape']
    %s3 = sshll.u32 1, 2
    %s4 = ssub.s32 %s3, 1
    %v5 = vld [vmem:[%s0] sm:%s4]
    %6 = vst [vmem:[#allocation1] sm:%s4] %v5
    %v7 = vld [vmem:[#allocation1] sm:$0x1]
    %vm8 = vcmask 130048
    %9 = vst.msk [vmem:[#allocation0] sm:$0x1] %vm8, %v7
    %s10 = scalar_lea.vmem [#allocation1], 1
    %v11 = vld [vmem:[%s10] sm:$0x1]
    %12 = vrot.lane.b32.xlu0 %v11, 16
    %v13 = vpop.permute.xlu0 %12
    %vm14 = vcmask 261248
    %15 = vst.msk [vmem:[#allocation0] sm:$0x1] %vm14, %v13
    %s17 = sshll.u32 1, 1
    %s18 = ssub.s32 %s17, 1
    %v20 = vld [vmem:[#allocation0] sm:%s18]
    %s21 = sshll.u32 1, 1
    %s22 = ssub.s32 %s21, 1
    %23 = vst [vmem:[%s1] sm:%s22] %v20

// kernel: basic_block_forward.1
$region0: #{basic_block_forward.1}
  #allocation0 [shape = 'u32[]', space=smem, size = 0x4, offset = 0x4, fixed_abs, tag = 'smem constant byte address 0x4 - core index']
  #allocation1 [shape = 'u32[144,128]{1,0:T(1,128)}', space=vmem, size = 0x12000, scoped, tag = 'internal scratch']
  %s0 = inlined_call_operand.vmem [shape: s32[1,32], index: 0, kind: input, shape index: {}]
  %s1 = inlined_call_operand.vmem [shape: f32[4,32], index: 1, kind: input, shape index: {}]
  %s2 = inlined_call_operand.vmem [shape: f32[8,36], index: 2, kind: input, shape index: {}]
  %s3 = inlined_call_operand.vmem [shape: f32[8,1], index: 3, kind: input, shape index: {}]
  %s4 = inlined_call_operand.vmem [shape: f32[8,32], index: 4, kind: output, shape index: {0}]
  %s5 = inlined_call_operand.vmem [shape: f32[1,8,2], index: 5, kind: output, shape index: {1}]
  %6 = xla_tuple %s4, %s5
  %s7 = sld [smem:[#allocation0]]
  $region34: #{basic_block_forward.1} parent=0
    _
  %s9 = ssub.s32 1, %s7
  %s10 = scalar_select 0, %s9, %s7
  // Predicated region
  $region2: #{basic_block_forward.1} parent=0 // pred_check
    _
  $region3: #{basic_block_forward.1} parent=0 // pred_check_branch
    %12 = sbr.rel (0) target = $region5
  $region4: #{basic_block_forward.1} parent=0 // pred_region
    _
  $region5: #{basic_block_forward.1} parent=0 // pred_fallthru
    _
  // Predicated region
  $region6: #{basic_block_forward.1} parent=0 // pred_check
    _
  $region7: #{basic_block_forward.1} parent=0 // pred_check_branch
    %14 = sbr.rel (0) target = $region9
  $region8: #{basic_block_forward.1} parent=0 // pred_region
    _
  $region9: #{basic_block_forward.1} parent=0 // pred_fallthru
    _
  // Predicated region
  $region10: #{basic_block_forward.1} parent=0 // pred_check
    _
  $region11: #{basic_block_forward.1} parent=0 // pred_check_branch
    %16 = sbr.rel (0) target = $region13
  $region12: #{basic_block_forward.1} parent=0 // pred_region
    _
  $region13: #{basic_block_forward.1} parent=0 // pred_fallthru
    _
  // Predicated region
  $region14: #{basic_block_forward.1} parent=0 // pred_check
    _
  $region15: #{basic_block_forward.1} parent=0 // pred_check_branch
    %18 = sbr.rel (0) target = $region17
  $region16: #{basic_block_forward.1} parent=0 // pred_region
    _
  $region17: #{basic_block_forward.1} parent=0 // pred_fallthru
    _
  %v19 = vld [vmem:[%s1] sm:$0xf]
  %v20 = vld [vmem:[%s0] sm:$0x1]
  %vm21 = vcmask 1047808
  %22 = vrot.lane.b32.xlu0 %v19, 32
  %v23 = vpop.permute.xlu0 %22
  %v24 = vsel %vm21, %v23, %v19
  %25 = vrot.lane.b32.xlu0 %v24, 32
  %v26 = vpop.permute.xlu0 %25
  %v27 = vsel %vm21, %v26, %v19
  %vm28 = vcmp.lt.s32.totalorder %v20, 4
  %v29 = vsel %vm28, 1, 0
  %v30 = vlaneseq
  %v31 = vshrl.u32 %v30, 7
  %v32 = vsub.s32 0, %v31
  %v33 = vrot.slane %v29, %v32
  %vm34 = vcmp.eq.s32.totalorder %v33, 1
  %36 = vrot.lane.b32.xlu0 %v27, 116
  %v37 = vpop.permute.xlu0 %36
  %39 = vrot.lane.b32.xlu0 %v27, 100
  %v40 = vpop.permute.xlu0 %39
  %v42 = vsel %vm34, %v37, %v40
  %vm43 = vcmp.lt.s32.totalorder %v20, 3
  %v44 = vsel %vm43, 1, 0
  %v45 = vlaneseq
  %v46 = vshrl.u32 %v45, 7
  %v47 = vsub.s32 0, %v46
  %v48 = vrot.slane %v44, %v47
  %vm49 = vcmp.eq.s32.totalorder %v48, 1
  %50 = vrot.lane.b32.xlu0 %v27, 115
  %v51 = vpop.permute.xlu0 %50
  %53 = vrot.lane.b32.xlu0 %v27, 99
  %v54 = vpop.permute.xlu0 %53
  %v56 = vsel %vm49, %v51, %v54
  %vm57 = vcmp.lt.s32.totalorder %v20, 2
  %v58 = vsel %vm57, 1, 0
  %v59 = vlaneseq
  %v60 = vshrl.u32 %v59, 7
  %v61 = vsub.s32 0, %v60
  %v62 = vrot.slane %v58, %v61
  %vm63 = vcmp.eq.s32.totalorder %v62, 1
  %64 = vrot.lane.b32.xlu0 %v27, 114
  %v65 = vpop.permute.xlu0 %64
  %67 = vrot.lane.b32.xlu0 %v27, 98
  %v68 = vpop.permute.xlu0 %67
  %v70 = vsel %vm63, %v65, %v68
  %vm71 = vcmp.lt.s32.totalorder %v20, 1
  %v72 = vsel %vm71, 1, 0
  %v73 = vlaneseq
  %v74 = vshrl.u32 %v73, 7
  %v75 = vsub.s32 0, %v74
  %v76 = vrot.slane %v72, %v75
  %vm77 = vcmp.eq.s32.totalorder %v76, 1
  %78 = vrot.lane.b32.xlu0 %v27, 113
  %v79 = vpop.permute.xlu0 %78
  %81 = vrot.lane.b32.xlu0 %v27, 97
  %v82 = vpop.permute.xlu0 %81
  %v84 = vsel %vm77, %v79, %v82
  %vm85 = vcmp.lt.s32.totalorder %v20, 15
  %v86 = vsel %vm85, 1, 0
  %v87 = vlaneseq
  %v88 = vshrl.u32 %v87, 7
  %v89 = vsub.s32 0, %v88
  %v90 = vrot.slane %v86, %v89
  %vm91 = vcmp.eq.s32.totalorder %v90, 1
  %92 = vrot.lane.b32.xlu0 %v27, 127
  %v93 = vpop.permute.xlu0 %92
  %95 = vrot.lane.b32.xlu0 %v27, 111
  %v96 = vpop.permute.xlu0 %95
  %v98 = vsel %vm91, %v93, %v96
  %vm99 = vcmp.lt.s32.totalorder %v20, 14
  %v100 = vsel %vm99, 1, 0
  %v101 = vlaneseq
  %v102 = vshrl.u32 %v101, 7
  %v103 = vsub.s32 0, %v102
  %v104 = vrot.slane %v100, %v103
  %vm105 = vcmp.eq.s32.totalorder %v104, 1
  %106 = vrot.lane.b32.xlu0 %v27, 126
  %v107 = vpop.permute.xlu0 %106
  %109 = vrot.lane.b32.xlu0 %v27, 110
  %v110 = vpop.permute.xlu0 %109
  %v112 = vsel %vm105, %v107, %v110
  %vm113 = vcmp.lt.s32.totalorder %v20, 13
  %v114 = vsel %vm113, 1, 0
  %v115 = vlaneseq
  %v116 = vshrl.u32 %v115, 7
  %v117 = vsub.s32 0, %v116
  %v118 = vrot.slane %v114, %v117
  %vm119 = vcmp.eq.s32.totalorder %v118, 1
  %120 = vrot.lane.b32.xlu0 %v27, 125
  %v121 = vpop.permute.xlu0 %120
  %123 = vrot.lane.b32.xlu0 %v27, 109
  %v124 = vpop.permute.xlu0 %123
  %v126 = vsel %vm119, %v121, %v124
  %vm127 = vcmp.lt.s32.totalorder %v20, 12
  %v128 = vsel %vm127, 1, 0
  %v129 = vlaneseq
  %v130 = vshrl.u32 %v129, 7
  %v131 = vsub.s32 0, %v130
  %v132 = vrot.slane %v128, %v131
  %vm133 = vcmp.eq.s32.totalorder %v132, 1
  %134 = vrot.lane.b32.xlu0 %v27, 124
  %v135 = vpop.permute.xlu0 %134
  %137 = vrot.lane.b32.xlu0 %v27, 108
  %v138 = vpop.permute.xlu0 %137
  %v140 = vsel %vm133, %v135, %v138
  %v142 = vrot.slane %v56, 4
  %v145 = vrot.slane %v84, 4
  %v148 = vrot.slane %v98, 4
  %v151 = vrot.slane %v126, 4
  %vm153 = vcmask 1043456
  %v154 = vsel %vm153, %v42, %v142
  %v155 = vsel %vm153, %v70, %v145
  %v156 = vsel %vm153, %v19, %v148
  %v157 = vsel %vm153, %v112, %v151
  %v158 = vld [vmem:[%s2] sm:$0xff]
  %v159 = vld [vmem:[%s3] sm:$0xff]
  %161 = vset.pattern.permute.xlu0 0
  %162 = vperm.xlu0 %161, %v159
  %v163 = vpop.permute.xlu0 %162
  %vm165 = vcmask 293888
  %v167 = vsel %vm165, %v158, 0
  %v170 = vsel %vm153, %v140, 0
  %172 = vmatprep.subr.mxu0 0.0
  %173 = vmatpush1.msra.mxu0 0.0
  %174 = vmatprep.subr.mxu0 0.0
  %175 = vmatpush1.msra.mxu0 0.0
  %176 = vmatprep.subr.mxu0 0.0
  %177 = vmatpush1.msra.mxu0 0.0
  %178 = vmatprep.subr.mxu0 0.0
  %179 = vmatpush1.msra.mxu0 0.0
  %180 = vmatprep.subr.mxu0 0.0
  %181 = vmatpush1.msra.mxu0 0.0
  %182 = vmatprep.subr.mxu0 0.0
  %183 = vmatpush1.msra.mxu0 0.0
  %184 = vmatprep.subr.mxu0 0.0
  %185 = vmatpush1.msra.mxu0 0.0
  %186 = vmatprep.subr.mxu0 0.0
  %187 = vmatpush1.msra.mxu0 0.0
  %188 = vmatprep.subr.mxu0 0.0
  %189 = vmatpush1.msra.mxu0 0.0
  %190 = vmatprep.subr.mxu0 0.0
  %191 = vmatpush1.msra.mxu0 0.0
  %192 = vmatprep.subr.mxu0 0.0
  %193 = vmatpush1.msra.mxu0 0.0
  %194 = vmatprep.subr.mxu0 0.0
  %195 = vmatpush1.msra.mxu0 %v170
  %196 = vmatprep.subr.mxu0 0.0
  %197 = vmatpush1.msra.mxu0 %v157
  %198 = vmatprep.subr.mxu0 0.0
  %199 = vmatpush1.msra.mxu0 %v156
  %200 = vmatprep.subr.mxu0 0.0
  %201 = vmatpush1.msra.mxu0 %v155
  %202 = vmatprep.subr.mxu0 0.0
  %203 = vmatpush1.msra.mxu0 %v154
  %204 = vmatprep.subr.mxu0 0.0
  %205 = vmatpush2.msra.mxu0 0.0
  %206 = vmatprep.subr.mxu0 0.0
  %207 = vmatpush2.msra.mxu0 0.0
  %208 = vmatprep.subr.mxu0 0.0
  %209 = vmatpush2.msra.mxu0 0.0
  %210 = vmatprep.subr.mxu0 0.0
  %211 = vmatpush2.msra.mxu0 0.0
  %212 = vmatprep.subr.mxu0 0.0
  %213 = vmatpush2.msra.mxu0 0.0
  %214 = vmatprep.subr.mxu0 0.0
  %215 = vmatpush2.msra.mxu0 0.0
  %216 = vmatprep.subr.mxu0 0.0
  %217 = vmatpush2.msra.mxu0 0.0
  %218 = vmatprep.subr.mxu0 0.0
  %219 = vmatpush2.msra.mxu0 0.0
  %220 = vmatprep.subr.mxu0 0.0
  %221 = vmatpush2.msra.mxu0 0.0
  %222 = vmatprep.subr.mxu0 0.0
  %223 = vmatpush2.msra.mxu0 0.0
  %224 = vmatprep.subr.mxu0 0.0
  %225 = vmatpush2.msra.mxu0 0.0
  %226 = vmatprep.subr.mxu0 0.0
  %227 = vmatpush2.msra.mxu0 0.0
  %228 = vmatprep.subr.mxu0 0.0
  %229 = vmatpush2.msra.mxu0 0.0
  %230 = vmatprep.subr.mxu0 0.0
  %231 = vmatpush2.msra.mxu0 0.0
  %232 = vmatprep.subr.mxu0 0.0
  %233 = vmatpush2.msra.mxu0 0.0
  %234 = vmatprep.subr.mxu0 0.0
  %235 = vmatpush2.msra.mxu0 0.0
  %236 = vmatprep.mubr.f32.mxu0 0.0
  %237 = vmatmul.mubr.f32.gmra.mxu0 %v167
  %v238 = vpop.f32.mrf.mxu0
  %v239 = vadd.f32 %v163, %v238
  %v240 = vpop.f32.mrf.mxu0
  %241 = vdwg.mxu0
  %v242 = vmax.f32 %v239, 0.0
  %vm243 = vcmask 261120
  %244 = vst.msk [vmem:[%s4] sm:$0xff] %vm243, %v242
  %v245 = vsel %vm243, %v242, 0.0
  %246 = vadd.xlane.f32.xlu0 %v245
  %v247 = vpop.xlane.xlu0 %246
  %vm248 = vcmask 7168
  %249 = vst.msk [vmem:[%s5] sm:$0xff] %vm248, %v247
  %v250 = vmul.f32 %v242, %v242
  %v251 = vsel %vm243, %v250, 0.0
  %252 = vadd.xlane.f32.xlu0 %v251
  %v253 = vpop.xlane.xlu0 %252
  %vm254 = vcmask 15368
  %255 = vst.msk [vmem:[%s5] sm:$0xff] %vm254, %v253
  // Predicated region
  $region18: #{basic_block_forward.1} parent=0 // pred_check
    _
  $region19: #{basic_block_forward.1} parent=0 // pred_check_branch
    %257 = sbr.rel (0) target = $region21
  $region20: #{basic_block_forward.1} parent=0 // pred_region
    _
  $region21: #{basic_block_forward.1} parent=0 // pred_fallthru
    _
  // Predicated region
  $region22: #{basic_block_forward.1} parent=0 // pred_check
    _
  $region23: #{basic_block_forward.1} parent=0 // pred_check_branch
    %259 = sbr.rel (0) target = $region25
  $region24: #{basic_block_forward.1} parent=0 // pred_region
    _
  $region25: #{basic_block_forward.1} parent=0 // pred_fallthru
    _
  // Predicated region
  $region26: #{basic_block_forward.1} parent=0 // pred_check
    _
  $region27: #{basic_block_forward.1} parent=0 // pred_check_branch
    %261 = sbr.rel (0) target = $region29
  $region28: #{basic_block_forward.1} parent=0 // pred_region
    _
  $region29: #{basic_block_forward.1} parent=0 // pred_fallthru
    _
  // Predicated region
  $region30: #{basic_block_forward.1} parent=0 // pred_check
    _
  $region31: #{basic_block_forward.1} parent=0 // pred_check_branch
    %263 = sbr.rel (0) target = $region33
  $region32: #{basic_block_forward.1} parent=0 // pred_region
    _
  $region33: #{basic_block_forward.1} parent=0 // pred_fallthru
    _

</llo_original>
